<compile_context>
chip_gen: v7x
topology: tpu7x:2x2x1
jax: 0.10.0
libtpu: 0.0.40
codegen_flags: <defaults>
</compile_context>

<pallas_src>
import jax
import jax.numpy as jnp
from jax.experimental import pallas as pl
from jax.experimental.pallas import tpu as pltpu

BN_EPS = 1e-5
# Per-grid-step working-set target: fits the 32 MiB scoped-VMEM default on v5e/v6e/v7x
# with headroom for double buffering and compiler scratch.
_VMEM_BUDGET = 20 * 1024 * 1024


def _stats_kernel(x_ref, w_ref, psum_ref, psq_ref):
    """Pass 1: conv tile + per-channel partial sum / sum-of-squares for BatchNorm.

    x_ref:    (tile_n, C_in, P)   stride-2 subsampled pixels, NCHW layout kept
    w_ref:    (C_out, C_in)
    psum_ref: (1, C_out, 1) f32   partial sum over this tile's pixels
    psq_ref:  (1, C_out, 1) f32   partial sum of squares
    """
    w = w_ref[...]                                   # native dtype straight into the MXU
    c_out = w.shape[0]
    s_acc = jnp.zeros((c_out, 1), jnp.float32)
    q_acc = jnp.zeros((c_out, 1), jnp.float32)
    for b in range(x_ref.shape[0]):                  # static, unrolled over images in tile
        y = jnp.dot(w, x_ref[b], preferred_element_type=jnp.float32)   # (C_out, P)
        s_acc = s_acc + jnp.sum(y, axis=1, keepdims=True)              # XLU reduce
        q_acc = q_acc + jnp.sum(y * y, axis=1, keepdims=True)
    psum_ref[0] = s_acc
    psq_ref[0] = q_acc


def _apply_kernel(x_ref, w_ref, scale_ref, shift_ref, o_ref):
    """Pass 2: recompute conv tile, apply folded BN scale/shift epilogue.

    scale_ref/shift_ref: (C_out, 1) f32, broadcast along the spatial (lane) axis.
    o_ref: (tile_n, C_out, P)
    """
    w = w_ref[...]
    scale = scale_ref[...]                           # hoisted out of the unrolled loop
    shift = shift_ref[...]
    for b in range(x_ref.shape[0]):                  # static, unrolled
        y = jnp.dot(w, x_ref[b], preferred_element_type=jnp.float32)   # (C_out, P)
        o_ref[b] = (y * scale + shift).astype(o_ref.dtype)


def _pick_tile_n(n, c_in, c_out, p, elem_bytes):
    """Largest power-of-two image tile that divides N and fits the VMEM budget."""
    tile_n = 1
    for cand in (8, 4, 2, 1):
        if n % cand == 0:
            tile_n = cand
            break

    def working_set(t):
        x_blk = 2 * t * c_in * p * elem_bytes        # double-buffered input tile
        o_blk = 2 * t * c_out * p * elem_bytes       # double-buffered output tile (pass 2)
        w_blk = 2 * c_out * c_in * elem_bytes
        y_tmp = c_out * p * 4                        # f32 matmul result
        stats = 8 * c_out * 4
        return x_blk + o_blk + w_blk + y_tmp + stats

    while tile_n > 1 and working_set(tile_n) > _VMEM_BUDGET:
        tile_n //= 2
    return tile_n, working_set(tile_n)


@jax.jit
def downsample_forward(x, conv_w, gamma, beta):
    """x: (N, C_in, H, W) NCHW.  conv_w: (C_out, C_in, 1, 1).  gamma/beta: (C_out,)."""
    n, c_in, h, w = x.shape
    c_out = conv_w.shape[0]

    # 1x1 kernel, stride 2, no padding => pure spatial subsample (no spatial mixing).
    xs = x[:, :, ::2, ::2]
    ho, wo = xs.shape[2], xs.shape[3]
    p = ho * wo
    xs = xs.reshape(n, c_in, p)                      # reshape only -- no transpose pass

    w_mat = conv_w.reshape(c_out, c_in)
    elem_bytes = x.dtype.itemsize
    tile_n, ws = _pick_tile_n(n, c_in, c_out, p, elem_bytes)
    num_b = n // tile_n
    vmem_limit = int(min(64 * 1024 * 1024, max(32 * 1024 * 1024, 2 * ws)))

    flops_conv = 2 * n * p * c_in * c_out
    x_bytes = n * c_in * p * elem_bytes
    w_bytes = c_out * c_in * elem_bytes

    # -------- pass 1: conv + per-tile partial BatchNorm statistics --------------------
    psum, psq = pl.pallas_call(
        _stats_kernel,
        grid=(num_b,),
        in_specs=[
            pl.BlockSpec((tile_n, c_in, p), lambda b: (b, 0, 0)),
            pl.BlockSpec((c_out, c_in), lambda b: (0, 0)),
        ],
        out_specs=[
            pl.BlockSpec((1, c_out, 1), lambda b: (b, 0, 0)),
            pl.BlockSpec((1, c_out, 1), lambda b: (b, 0, 0)),
        ],
        out_shape=[
            jax.ShapeDtypeStruct((num_b, c_out, 1), jnp.float32),
            jax.ShapeDtypeStruct((num_b, c_out, 1), jnp.float32),
        ],
        compiler_params=pltpu.CompilerParams(
            dimension_semantics=("parallel",),       # per-tile partials -> megacore-friendly
            vmem_limit_bytes=vmem_limit,
        ),
        cost_estimate=pl.CostEstimate(
            flops=flops_conv,
            transcendentals=0,
            bytes_accessed=x_bytes + w_bytes + 2 * num_b * c_out * 4,
        ),
    )(xs, w_mat)

    # -------- finalize BN statistics (tiny per-channel math, plain JAX) ----------------
    m = float(n * p)                                 # pixels per channel (biased variance)
    s = jnp.sum(psum, axis=0)                        # (C_out, 1)
    sq = jnp.sum(psq, axis=0)                        # (C_out, 1)
    mean = s / m
    # One-pass E[y^2] - E[y]^2 with f32 accumulators; clamp guards cancellation residue.
    var = jnp.maximum(sq / m - mean * mean, 0.0)
    inv_std = jax.lax.rsqrt(var + BN_EPS)
    scale = gamma.astype(jnp.float32).reshape(c_out, 1) * inv_std
    shift = beta.astype(jnp.float32).reshape(c_out, 1) - mean * scale

    # -------- pass 2: recompute conv tile, folded scale/shift epilogue ----------------
    out_flat = pl.pallas_call(
        _apply_kernel,
        grid=(num_b,),
        in_specs=[
            pl.BlockSpec((tile_n, c_in, p), lambda b: (b, 0, 0)),
            pl.BlockSpec((c_out, c_in), lambda b: (0, 0)),
            pl.BlockSpec((c_out, 1), lambda b: (0, 0)),
            pl.BlockSpec((c_out, 1), lambda b: (0, 0)),
        ],
        out_specs=pl.BlockSpec((tile_n, c_out, p), lambda b: (b, 0, 0)),
        out_shape=jax.ShapeDtypeStruct((n, c_out, p), x.dtype),
        compiler_params=pltpu.CompilerParams(
            dimension_semantics=("parallel",),
            vmem_limit_bytes=vmem_limit,
        ),
        cost_estimate=pl.CostEstimate(
            flops=flops_conv + 2 * n * p * c_out,
            transcendentals=0,
            bytes_accessed=x_bytes + w_bytes + n * c_out * p * elem_bytes,
        ),
    )(xs, w_mat, scale, shift)

    # (N, C_out, Ho*Wo) -> (N, C_out, Ho, Wo): pure reshape, still no transpose pass.
    return out_flat.reshape(n, c_out, ho, wo)


def _reference(x, conv_w, gamma, beta):
    # Pure-JAX reference: Conv2d(1x1, stride 2, bias=False) + BatchNorm2d (train mode).
    xs = x[:, :, ::2, ::2]
    y = jnp.einsum('nchw,oc->nohw', xs, conv_w.reshape(conv_w.shape[0], conv_w.shape[1]))
    mean = jnp.mean(y, axis=(0, 2, 3), keepdims=True)
    var = jnp.mean((y - mean) ** 2, axis=(0, 2, 3), keepdims=True)
    return (y - mean) / jnp.sqrt(var + BN_EPS) * gamma.reshape(1, -1, 1, 1) \
        + beta.reshape(1, -1, 1, 1)


if __name__ == "__main__":
    key = jax.random.PRNGKey(0)
    k_x, k_w, k_g, k_b = jax.random.split(key, 4)

    N, C_IN, H, W = 2, 4, 16, 16
    C_OUT = 8

    x = jax.random.normal(k_x, (N, C_IN, H, W), dtype=jnp.float32)
    conv_w = jax.random.normal(k_w, (C_OUT, C_IN, 1, 1), dtype=jnp.float32) * 0.1
    gamma = 1.0 + 0.1 * jax.random.normal(k_g, (C_OUT,), dtype=jnp.float32)
    beta = 0.1 * jax.random.normal(k_b, (C_OUT,), dtype=jnp.float32)

    out = jax.block_until_ready(downsample_forward(x, conv_w, gamma, beta))
    ref = jax.block_until_ready(_reference(x, conv_w, gamma, beta))

    assert out.shape == (N, C_OUT, H // 2, W // 2), out.shape
    err = float(jnp.max(jnp.abs(out - ref)))
    assert err < 1e-4, err
    print("KERNEL_OK")
</pallas_src>

<mosaic_0001>
module attributes {stable_mosaic.version = 11 : i64} {
  func.func @_stats_kernel(%arg0: i32, %arg1: memref<2x4x64xf32, #tpu.memory_space<vmem>>, %arg2: memref<8x4xf32, #tpu.memory_space<vmem>>, %arg3: memref<1x8x1xf32, #tpu.memory_space<vmem>>, %arg4: memref<1x8x1xf32, #tpu.memory_space<vmem>>) attributes {dimension_semantics = [#tpu.dimension_semantics<parallel>], iteration_bounds = array<i64: 1>, scalar_prefetch = 0 : i64, scratch_operands = 0 : i64, tpu.core_type = #tpu.core_type<tc>, window_params = [{transform_indices = @transform_0, window_bounds = array<i64: 2, 4, 64>}, {pipeline_mode = #tpu.pipeline_mode<synchronous>, transform_indices = @transform_1, window_bounds = array<i64: 8, 4>}, {transform_indices = @transform_2, window_bounds = array<i64: 1, 8, 1>}, {transform_indices = @transform_3, window_bounds = array<i64: 1, 8, 1>}]} {
    %c0 = arith.constant 0 : index
    %c0_0 = arith.constant 0 : index
    %0 = vector.load %arg2[%c0, %c0_0] : memref<8x4xf32, #tpu.memory_space<vmem>>, vector<8x4xf32>
    %cst = arith.constant 0.000000e+00 : f32
    %1 = vector.broadcast %cst : f32 to vector<8x1xf32>
    %cst_1 = arith.constant 0.000000e+00 : f32
    %2 = vector.broadcast %cst_1 : f32 to vector<8x1xf32>
    %c0_2 = arith.constant 0 : index
    %c0_3 = arith.constant 0 : index
    %c0_4 = arith.constant 0 : index
    %3 = vector.load %arg1[%c0_2, %c0_3, %c0_4] : memref<2x4x64xf32, #tpu.memory_space<vmem>>, vector<1x4x64xf32>
    %4 = vector.shape_cast %3 : vector<1x4x64xf32> to vector<4x64xf32>
    %cst_5 = arith.constant dense<0.000000e+00> : vector<8x64xf32>
    %5 = tpu.matmul %0, %4, %cst_5 {dimension_numbers = #tpu.dot_dimension_numbers<[1], [0], [0], [1], [0, 0, 1, 1], [], []>} : vector<8x4xf32>, vector<4x64xf32>, vector<8x64xf32> -> vector<8x64xf32>
    %cst_6 = arith.constant dense<0.000000e+00> : vector<8xf32>
    %6 = vector.multi_reduction <add>, %5, %cst_6 [1] : vector<8x64xf32> to vector<8xf32>
    %7 = vector.shape_cast %6 : vector<8xf32> to vector<8x1xf32>
    %8 = arith.addf %1, %7 : vector<8x1xf32>
    %9 = arith.mulf %5, %5 : vector<8x64xf32>
    %cst_7 = arith.constant dense<0.000000e+00> : vector<8xf32>
    %10 = vector.multi_reduction <add>, %9, %cst_7 [1] : vector<8x64xf32> to vector<8xf32>
    %11 = vector.shape_cast %10 : vector<8xf32> to vector<8x1xf32>
    %12 = arith.addf %2, %11 : vector<8x1xf32>
    %c1 = arith.constant 1 : index
    %c0_8 = arith.constant 0 : index
    %c0_9 = arith.constant 0 : index
    %13 = vector.load %arg1[%c1, %c0_8, %c0_9] : memref<2x4x64xf32, #tpu.memory_space<vmem>>, vector<1x4x64xf32>
    %14 = vector.shape_cast %13 : vector<1x4x64xf32> to vector<4x64xf32>
    %cst_10 = arith.constant dense<0.000000e+00> : vector<8x64xf32>
    %15 = tpu.matmul %0, %14, %cst_10 {dimension_numbers = #tpu.dot_dimension_numbers<[1], [0], [0], [1], [0, 0, 1, 1], [], []>} : vector<8x4xf32>, vector<4x64xf32>, vector<8x64xf32> -> vector<8x64xf32>
    %cst_11 = arith.constant dense<0.000000e+00> : vector<8xf32>
    %16 = vector.multi_reduction <add>, %15, %cst_11 [1] : vector<8x64xf32> to vector<8xf32>
    %17 = vector.shape_cast %16 : vector<8xf32> to vector<8x1xf32>
    %18 = arith.addf %8, %17 : vector<8x1xf32>
    %19 = arith.mulf %15, %15 : vector<8x64xf32>
    %cst_12 = arith.constant dense<0.000000e+00> : vector<8xf32>
    %20 = vector.multi_reduction <add>, %19, %cst_12 [1] : vector<8x64xf32> to vector<8xf32>
    %21 = vector.shape_cast %20 : vector<8xf32> to vector<8x1xf32>
    %22 = arith.addf %12, %21 : vector<8x1xf32>
    %c0_13 = arith.constant 0 : index
    %c0_14 = arith.constant 0 : index
    %c0_15 = arith.constant 0 : index
    %23 = vector.load %arg3[%c0_13, %c0_14, %c0_15] : memref<1x8x1xf32, #tpu.memory_space<vmem>>, vector<1x8x1xf32>
    %24 = vector.shape_cast %23 : vector<1x8x1xf32> to vector<8x1xf32>
    %25 = vector.shape_cast %18 : vector<8x1xf32> to vector<1x8x1xf32>
    tpu.vector_store %arg3[%c0_13, %c0_14, %c0_15], %25 {strides = array<i32>} : memref<1x8x1xf32, #tpu.memory_space<vmem>>, vector<1x8x1xf32>,
    %c0_16 = arith.constant 0 : index
    %c0_17 = arith.constant 0 : index
    %c0_18 = arith.constant 0 : index
    %26 = vector.load %arg4[%c0_16, %c0_17, %c0_18] : memref<1x8x1xf32, #tpu.memory_space<vmem>>, vector<1x8x1xf32>
    %27 = vector.shape_cast %26 : vector<1x8x1xf32> to vector<8x1xf32>
    %28 = vector.shape_cast %22 : vector<8x1xf32> to vector<1x8x1xf32>
    tpu.vector_store %arg4[%c0_16, %c0_17, %c0_18], %28 {strides = array<i32>} : memref<1x8x1xf32, #tpu.memory_space<vmem>>, vector<1x8x1xf32>,
    return
  }
  func.func @transform_0(%arg0: i32) -> (i32, i32, i32) {
    %c0_i32 = arith.constant 0 : i32
    %c0_i32_0 = arith.constant 0 : i32
    %c0_i32_1 = arith.constant 0 : i32
    return %arg0, %c0_i32, %c0_i32_0 : i32, i32, i32
  }
  func.func @transform_1(%arg0: i32) -> (i32, i32) {
    %c0_i32 = arith.constant 0 : i32
    %c0_i32_0 = arith.constant 0 : i32
    %c0_i32_1 = arith.constant 0 : i32
    return %c0_i32, %c0_i32_0 : i32, i32
  }
  func.func @transform_2(%arg0: i32) -> (i32, i32, i32) {
    %c0_i32 = arith.constant 0 : i32
    %c0_i32_0 = arith.constant 0 : i32
    %c0_i32_1 = arith.constant 0 : i32
    return %arg0, %c0_i32, %c0_i32_0 : i32, i32, i32
  }
  func.func @transform_3(%arg0: i32) -> (i32, i32, i32) {
    %c0_i32 = arith.constant 0 : i32
    %c0_i32_0 = arith.constant 0 : i32
    %c0_i32_1 = arith.constant 0 : i32
    return %arg0, %c0_i32, %c0_i32_0 : i32, i32, i32
  }
}

module attributes {stable_mosaic.version = 11 : i64} {
  func.func @_apply_kernel(%arg0: i32, %arg1: memref<2x4x64xf32, #tpu.memory_space<vmem>>, %arg2: memref<8x4xf32, #tpu.memory_space<vmem>>, %arg3: memref<8x1xf32, #tpu.memory_space<vmem>>, %arg4: memref<8x1xf32, #tpu.memory_space<vmem>>, %arg5: memref<2x8x64xf32, #tpu.memory_space<vmem>>) attributes {dimension_semantics = [#tpu.dimension_semantics<parallel>], iteration_bounds = array<i64: 1>, scalar_prefetch = 0 : i64, scratch_operands = 0 : i64, tpu.core_type = #tpu.core_type<tc>, window_params = [{transform_indices = @transform_0, window_bounds = array<i64: 2, 4, 64>}, {pipeline_mode = #tpu.pipeline_mode<synchronous>, transform_indices = @transform_1, window_bounds = array<i64: 8, 4>}, {pipeline_mode = #tpu.pipeline_mode<synchronous>, transform_indices = @transform_2, window_bounds = array<i64: 8, 1>}, {pipeline_mode = #tpu.pipeline_mode<synchronous>, transform_indices = @transform_3, window_bounds = array<i64: 8, 1>}, {transform_indices = @transform_4, window_bounds = array<i64: 2, 8, 64>}]} {
    %c0 = arith.constant 0 : index
    %c0_0 = arith.constant 0 : index
    %0 = vector.load %arg2[%c0, %c0_0] : memref<8x4xf32, #tpu.memory_space<vmem>>, vector<8x4xf32>
    %c0_1 = arith.constant 0 : index
    %c0_2 = arith.constant 0 : index
    %1 = vector.load %arg3[%c0_1, %c0_2] : memref<8x1xf32, #tpu.memory_space<vmem>>, vector<8x1xf32>
    %c0_3 = arith.constant 0 : index
    %c0_4 = arith.constant 0 : index
    %2 = vector.load %arg4[%c0_3, %c0_4] : memref<8x1xf32, #tpu.memory_space<vmem>>, vector<8x1xf32>
    %c0_5 = arith.constant 0 : index
    %c0_6 = arith.constant 0 : index
    %c0_7 = arith.constant 0 : index
    %3 = vector.load %arg1[%c0_5, %c0_6, %c0_7] : memref<2x4x64xf32, #tpu.memory_space<vmem>>, vector<1x4x64xf32>
    %4 = vector.shape_cast %3 : vector<1x4x64xf32> to vector<4x64xf32>
    %cst = arith.constant dense<0.000000e+00> : vector<8x64xf32>
    %5 = tpu.matmul %0, %4, %cst {dimension_numbers = #tpu.dot_dimension_numbers<[1], [0], [0], [1], [0, 0, 1, 1], [], []>} : vector<8x4xf32>, vector<4x64xf32>, vector<8x64xf32> -> vector<8x64xf32>
    %6 = vector.broadcast %1 : vector<8x1xf32> to vector<8x64xf32>
    %7 = arith.mulf %5, %6 : vector<8x64xf32>
    %8 = vector.broadcast %2 : vector<8x1xf32> to vector<8x64xf32>
    %9 = arith.addf %7, %8 : vector<8x64xf32>
    %c0_8 = arith.constant 0 : index
    %c0_9 = arith.constant 0 : index
    %c0_10 = arith.constant 0 : index
    %10 = vector.load %arg5[%c0_8, %c0_9, %c0_10] : memref<2x8x64xf32, #tpu.memory_space<vmem>>, vector<1x8x64xf32>
    %11 = vector.shape_cast %10 : vector<1x8x64xf32> to vector<8x64xf32>
    %12 = vector.shape_cast %9 : vector<8x64xf32> to vector<1x8x64xf32>
    tpu.vector_store %arg5[%c0_8, %c0_9, %c0_10], %12 {strides = array<i32>} : memref<2x8x64xf32, #tpu.memory_space<vmem>>, vector<1x8x64xf32>,
    %c1 = arith.constant 1 : index
    %c0_11 = arith.constant 0 : index
    %c0_12 = arith.constant 0 : index
    %13 = vector.load %arg1[%c1, %c0_11, %c0_12] : memref<2x4x64xf32, #tpu.memory_space<vmem>>, vector<1x4x64xf32>
    %14 = vector.shape_cast %13 : vector<1x4x64xf32> to vector<4x64xf32>
    %cst_13 = arith.constant dense<0.000000e+00> : vector<8x64xf32>
    %15 = tpu.matmul %0, %14, %cst_13 {dimension_numbers = #tpu.dot_dimension_numbers<[1], [0], [0], [1], [0, 0, 1, 1], [], []>} : vector<8x4xf32>, vector<4x64xf32>, vector<8x64xf32> -> vector<8x64xf32>
    %16 = vector.broadcast %1 : vector<8x1xf32> to vector<8x64xf32>
    %17 = arith.mulf %15, %16 : vector<8x64xf32>
    %18 = vector.broadcast %2 : vector<8x1xf32> to vector<8x64xf32>
    %19 = arith.addf %17, %18 : vector<8x64xf32>
    %c1_14 = arith.constant 1 : index
    %c0_15 = arith.constant 0 : index
    %c0_16 = arith.constant 0 : index
    %20 = vector.load %arg5[%c1_14, %c0_15, %c0_16] : memref<2x8x64xf32, #tpu.memory_space<vmem>>, vector<1x8x64xf32>
    %21 = vector.shape_cast %20 : vector<1x8x64xf32> to vector<8x64xf32>
    %22 = vector.shape_cast %19 : vector<8x64xf32> to vector<1x8x64xf32>
    tpu.vector_store %arg5[%c1_14, %c0_15, %c0_16], %22 {strides = array<i32>} : memref<2x8x64xf32, #tpu.memory_space<vmem>>, vector<1x8x64xf32>,
    return
  }
  func.func @transform_0(%arg0: i32) -> (i32, i32, i32) {
    %c0_i32 = arith.constant 0 : i32
    %c0_i32_0 = arith.constant 0 : i32
    %c0_i32_1 = arith.constant 0 : i32
    return %arg0, %c0_i32, %c0_i32_0 : i32, i32, i32
  }
  func.func @transform_1(%arg0: i32) -> (i32, i32) {
    %c0_i32 = arith.constant 0 : i32
    %c0_i32_0 = arith.constant 0 : i32
    %c0_i32_1 = arith.constant 0 : i32
    return %c0_i32, %c0_i32_0 : i32, i32
  }
  func.func @transform_2(%arg0: i32) -> (i32, i32) {
    %c0_i32 = arith.constant 0 : i32
    %c0_i32_0 = arith.constant 0 : i32
    %c0_i32_1 = arith.constant 0 : i32
    return %c0_i32, %c0_i32_0 : i32, i32
  }
  func.func @transform_3(%arg0: i32) -> (i32, i32) {
    %c0_i32 = arith.constant 0 : i32
    %c0_i32_0 = arith.constant 0 : i32
    %c0_i32_1 = arith.constant 0 : i32
    return %c0_i32, %c0_i32_0 : i32, i32
  }
  func.func @transform_4(%arg0: i32) -> (i32, i32, i32) {
    %c0_i32 = arith.constant 0 : i32
    %c0_i32_0 = arith.constant 0 : i32
    %c0_i32_1 = arith.constant 0 : i32
    return %arg0, %c0_i32, %c0_i32_0 : i32, i32, i32
  }
}

</mosaic_0001>

<llo_original>
// kernel: downsample_forward.2
$region0: #{downsample_forward.2}
  #allocation0 [shape = 'u32[]', space=smem, size = 0x4, offset = 0x4, fixed_abs, tag = 'smem constant byte address 0x4 - core index']
  #allocation1 [shape = 'u32[144,128]{1,0:T(1,128)}', space=vmem, size = 0x12000, scoped, tag = 'internal scratch']
  %s0 = inlined_call_operand.vmem [shape: f32[2,4,64], index: 0, kind: input, shape index: {}]
  %s1 = inlined_call_operand.vmem [shape: f32[8,4], index: 1, kind: input, shape index: {}]
  %s2 = inlined_call_operand.vmem [shape: f32[1,8,1], index: 2, kind: output, shape index: {0}]
  %s3 = inlined_call_operand.vmem [shape: f32[1,8,1], index: 3, kind: output, shape index: {1}]
  %4 = xla_tuple %s2, %s3
  %s5 = sld [smem:[#allocation0]]
  $region26: #{downsample_forward.2} parent=0
    _
  %s7 = ssub.s32 1, %s5
  %s8 = scalar_select 0, %s7, %s5
  // Predicated region
  $region2: #{downsample_forward.2} parent=0 // pred_check
    _
  $region3: #{downsample_forward.2} parent=0 // pred_check_branch
    %10 = sbr.rel (0) target = $region5
  $region4: #{downsample_forward.2} parent=0 // pred_region
    _
  $region5: #{downsample_forward.2} parent=0 // pred_fallthru
    _
  // Predicated region
  $region6: #{downsample_forward.2} parent=0 // pred_check
    _
  $region7: #{downsample_forward.2} parent=0 // pred_check_branch
    %12 = sbr.rel (0) target = $region9
  $region8: #{downsample_forward.2} parent=0 // pred_region
    _
  $region9: #{downsample_forward.2} parent=0 // pred_fallthru
    _
  %v13 = vld [vmem:[%s1] sm:$0xff]
  %v14 = vld [vmem:[%s0] sm:$0xf]
  %vm15 = vcmask 31744
  %v17 = vsel %vm15, %v13, 0
  %vm19 = vcmask 1043456
  %v21 = vsel %vm19, %v14, 0
  %23 = vmatprep.subr.mxu0 0.0
  %24 = vmatpush1.msra.mxu0 %v21
  %25 = vmatprep.subr.mxu0 0.0
  %26 = vmatpush1.msra.mxu0 0.0
  %27 = vmatprep.subr.mxu0 0.0
  %28 = vmatpush1.msra.mxu0 0.0
  %29 = vmatprep.subr.mxu0 0.0
  %30 = vmatpush1.msra.mxu0 0.0
  %31 = vmatprep.subr.mxu0 0.0
  %32 = vmatpush1.msra.mxu0 0.0
  %33 = vmatprep.subr.mxu0 0.0
  %34 = vmatpush1.msra.mxu0 0.0
  %35 = vmatprep.subr.mxu0 0.0
  %36 = vmatpush1.msra.mxu0 0.0
  %37 = vmatprep.subr.mxu0 0.0
  %38 = vmatpush1.msra.mxu0 0.0
  %39 = vmatprep.subr.mxu0 0.0
  %40 = vmatpush1.msra.mxu0 0.0
  %41 = vmatprep.subr.mxu0 0.0
  %42 = vmatpush1.msra.mxu0 0.0
  %43 = vmatprep.subr.mxu0 0.0
  %44 = vmatpush1.msra.mxu0 0.0
  %45 = vmatprep.subr.mxu0 0.0
  %46 = vmatpush1.msra.mxu0 0.0
  %47 = vmatprep.subr.mxu0 0.0
  %48 = vmatpush1.msra.mxu0 0.0
  %49 = vmatprep.subr.mxu0 0.0
  %50 = vmatpush1.msra.mxu0 0.0
  %51 = vmatprep.subr.mxu0 0.0
  %52 = vmatpush1.msra.mxu0 0.0
  %53 = vmatprep.subr.mxu0 0.0
  %54 = vmatpush1.msra.mxu0 0.0
  %55 = vmatprep.subr.mxu0 0.0
  %56 = vmatpush1.msra.mxu0 0.0
  %57 = vmatprep.subr.mxu0 0.0
  %58 = vmatpush1.msra.mxu0 0.0
  %59 = vmatprep.subr.mxu0 0.0
  %60 = vmatpush1.msra.mxu0 0.0
  %61 = vmatprep.subr.mxu0 0.0
  %62 = vmatpush1.msra.mxu0 0.0
  %63 = vmatprep.subr.mxu0 0.0
  %64 = vmatpush1.msra.mxu0 0.0
  %65 = vmatprep.subr.mxu0 0.0
  %66 = vmatpush1.msra.mxu0 0.0
  %67 = vmatprep.subr.mxu0 0.0
  %68 = vmatpush1.msra.mxu0 0.0
  %69 = vmatprep.subr.mxu0 0.0
  %70 = vmatpush1.msra.mxu0 0.0
  %71 = vmatprep.subr.mxu0 0.0
  %72 = vmatpush1.msra.mxu0 0.0
  %73 = vmatprep.subr.mxu0 0.0
  %74 = vmatpush1.msra.mxu0 0.0
  %75 = vmatprep.subr.mxu0 0.0
  %76 = vmatpush1.msra.mxu0 0.0
  %77 = vmatprep.subr.mxu0 0.0
  %78 = vmatpush1.msra.mxu0 0.0
  %79 = vmatprep.subr.mxu0 0.0
  %80 = vmatpush1.msra.mxu0 0.0
  %81 = vmatprep.subr.mxu0 0.0
  %82 = vmatpush1.msra.mxu0 0.0
  %83 = vmatprep.subr.mxu0 0.0
  %84 = vmatpush1.msra.mxu0 0.0
  %85 = vmatprep.subr.mxu0 0.0
  %86 = vmatpush1.msra.mxu0 0.0
  %87 = vmatprep.mubr.f32.mxu0 0.0
  %88 = vmatmul.mubr.f32.gmra.mrb[0].mxu0 %v17
  %v89 = vpop.f32.mrb[0].mxu0
  %v90 = vadd.f32 0.0, %v89
  %v91 = vpop.f32.mrb[0].mxu0
  %92 = vdwg.mxu0
  %vm93 = vcmask 523264
  %v94 = vsel %vm93, %v90, 0.0
  %95 = vadd.xlane.f32.xlu0 %v94
  %v96 = vpop.xlane.xlu0 %95
  %v97 = vadd.f32 %v96, 0.0
  %v98 = vmul.f32 %v90, %v90
  %v99 = vsel %vm93, %v98, 0.0
  %100 = vadd.xlane.f32.xlu0 %v99
  %v101 = vpop.xlane.xlu0 %100
  %v102 = vadd.f32 %v101, 0.0
  %s103 = scalar_lea.vmem %s0, 4
  %v104 = vld [vmem:[%s103] sm:$0xf]
  %v106 = vsel %vm19, %v104, 0
  %108 = vmatprep.subr.mxu0 0.0
  %109 = vmatpush1.msra.mxu0 %v106
  %110 = vmatprep.subr.mxu0 0.0
  %111 = vmatpush1.msra.mxu0 0.0
  %112 = vmatprep.subr.mxu0 0.0
  %113 = vmatpush1.msra.mxu0 0.0
  %114 = vmatprep.subr.mxu0 0.0
  %115 = vmatpush1.msra.mxu0 0.0
  %116 = vmatprep.subr.mxu0 0.0
  %117 = vmatpush1.msra.mxu0 0.0
  %118 = vmatprep.subr.mxu0 0.0
  %119 = vmatpush1.msra.mxu0 0.0
  %120 = vmatprep.subr.mxu0 0.0
  %121 = vmatpush1.msra.mxu0 0.0
  %122 = vmatprep.subr.mxu0 0.0
  %123 = vmatpush1.msra.mxu0 0.0
  %124 = vmatprep.subr.mxu0 0.0
  %125 = vmatpush1.msra.mxu0 0.0
  %126 = vmatprep.subr.mxu0 0.0
  %127 = vmatpush1.msra.mxu0 0.0
  %128 = vmatprep.subr.mxu0 0.0
  %129 = vmatpush1.msra.mxu0 0.0
  %130 = vmatprep.subr.mxu0 0.0
  %131 = vmatpush1.msra.mxu0 0.0
  %132 = vmatprep.subr.mxu0 0.0
  %133 = vmatpush1.msra.mxu0 0.0
  %134 = vmatprep.subr.mxu0 0.0
  %135 = vmatpush1.msra.mxu0 0.0
  %136 = vmatprep.subr.mxu0 0.0
  %137 = vmatpush1.msra.mxu0 0.0
  %138 = vmatprep.subr.mxu0 0.0
  %139 = vmatpush1.msra.mxu0 0.0
  %140 = vmatprep.subr.mxu0 0.0
  %141 = vmatpush1.msra.mxu0 0.0
  %142 = vmatprep.subr.mxu0 0.0
  %143 = vmatpush1.msra.mxu0 0.0
  %144 = vmatprep.subr.mxu0 0.0
  %145 = vmatpush1.msra.mxu0 0.0
  %146 = vmatprep.subr.mxu0 0.0
  %147 = vmatpush1.msra.mxu0 0.0
  %148 = vmatprep.subr.mxu0 0.0
  %149 = vmatpush1.msra.mxu0 0.0
  %150 = vmatprep.subr.mxu0 0.0
  %151 = vmatpush1.msra.mxu0 0.0
  %152 = vmatprep.subr.mxu0 0.0
  %153 = vmatpush1.msra.mxu0 0.0
  %154 = vmatprep.subr.mxu0 0.0
  %155 = vmatpush1.msra.mxu0 0.0
  %156 = vmatprep.subr.mxu0 0.0
  %157 = vmatpush1.msra.mxu0 0.0
  %158 = vmatprep.subr.mxu0 0.0
  %159 = vmatpush1.msra.mxu0 0.0
  %160 = vmatprep.subr.mxu0 0.0
  %161 = vmatpush1.msra.mxu0 0.0
  %162 = vmatprep.subr.mxu0 0.0
  %163 = vmatpush1.msra.mxu0 0.0
  %164 = vmatprep.subr.mxu0 0.0
  %165 = vmatpush1.msra.mxu0 0.0
  %166 = vmatprep.subr.mxu0 0.0
  %167 = vmatpush1.msra.mxu0 0.0
  %168 = vmatprep.subr.mxu0 0.0
  %169 = vmatpush1.msra.mxu0 0.0
  %170 = vmatprep.subr.mxu0 0.0
  %171 = vmatpush1.msra.mxu0 0.0
  %172 = vmatprep.mubr.f32.mxu0 0.0
  %173 = vmatmul.mubr.f32.gmra.mrb[0].mxu0 %v17
  %v174 = vpop.f32.mrb[0].mxu0
  %v175 = vadd.f32 0.0, %v174
  %v176 = vpop.f32.mrb[0].mxu0
  %177 = vdwg.mxu0
  %v178 = vsel %vm93, %v175, 0.0
  %179 = vadd.xlane.f32.xlu0 %v178
  %v180 = vpop.xlane.xlu0 %179
  %v181 = vadd.f32 %v97, %v180
  %v182 = vmul.f32 %v175, %v175
  %v183 = vsel %vm93, %v182, 0.0
  %184 = vadd.xlane.f32.xlu0 %v183
  %v185 = vpop.xlane.xlu0 %184
  %v186 = vadd.f32 %v102, %v185
  %vm187 = vcmask 7168
  %188 = vst.msk [vmem:[%s2] sm:$0xff] %vm187, %v181
  %189 = vst.msk [vmem:[%s3] sm:$0xff] %vm187, %v186
  // Predicated region
  $region10: #{downsample_forward.2} parent=0 // pred_check
    _
  $region11: #{downsample_forward.2} parent=0 // pred_check_branch
    %191 = sbr.rel (0) target = $region13
  $region12: #{downsample_forward.2} parent=0 // pred_region
    _
  $region13: #{downsample_forward.2} parent=0 // pred_fallthru
    _
  // Predicated region
  $region14: #{downsample_forward.2} parent=0 // pred_check
    _
  $region15: #{downsample_forward.2} parent=0 // pred_check_branch
    %193 = sbr.rel (0) target = $region17
  $region16: #{downsample_forward.2} parent=0 // pred_region
    _
  $region17: #{downsample_forward.2} parent=0 // pred_fallthru
    _
  // Predicated region
  $region18: #{downsample_forward.2} parent=0 // pred_check
    _
  $region19: #{downsample_forward.2} parent=0 // pred_check_branch
    %195 = sbr.rel (0) target = $region21
  $region20: #{downsample_forward.2} parent=0 // pred_region
    _
  $region21: #{downsample_forward.2} parent=0 // pred_fallthru
    _
  // Predicated region
  $region22: #{downsample_forward.2} parent=0 // pred_check
    _
  $region23: #{downsample_forward.2} parent=0 // pred_check_branch
    %197 = sbr.rel (0) target = $region25
  $region24: #{downsample_forward.2} parent=0 // pred_region
    _
  $region25: #{downsample_forward.2} parent=0 // pred_fallthru
    _

// kernel: downsample_forward.3
$region0: #{downsample_forward.3}
  #allocation0 [shape = 'u32[]', space=smem, size = 0x4, offset = 0x4, fixed_abs, tag = 'smem constant byte address 0x4 - core index']
  #allocation1 [shape = 'u32[144,128]{1,0:T(1,128)}', space=vmem, size = 0x12000, scoped, tag = 'internal scratch']
  %s0 = inlined_call_operand.vmem [shape: f32[2,4,64], index: 0, kind: input, shape index: {}]
  %s1 = inlined_call_operand.vmem [shape: f32[8,4], index: 1, kind: input, shape index: {}]
  %s2 = inlined_call_operand.vmem [shape: f32[8,1], index: 2, kind: input, shape index: {}]
  %s3 = inlined_call_operand.vmem [shape: f32[8,1], index: 3, kind: input, shape index: {}]
  %s4 = inlined_call_operand.vmem [shape: f32[2,8,64], index: 4, kind: output, shape index: {}]
  %s5 = sld [smem:[#allocation0]]
  $region26: #{downsample_forward.3} parent=0
    _
  %s7 = ssub.s32 1, %s5
  %s8 = scalar_select 0, %s7, %s5
  // Predicated region
  $region2: #{downsample_forward.3} parent=0 // pred_check
    _
  $region3: #{downsample_forward.3} parent=0 // pred_check_branch
    %10 = sbr.rel (0) target = $region5
  $region4: #{downsample_forward.3} parent=0 // pred_region
    _
  $region5: #{downsample_forward.3} parent=0 // pred_fallthru
    _
  // Predicated region
  $region6: #{downsample_forward.3} parent=0 // pred_check
    _
  $region7: #{downsample_forward.3} parent=0 // pred_check_branch
    %12 = sbr.rel (0) target = $region9
  $region8: #{downsample_forward.3} parent=0 // pred_region
    _
  $region9: #{downsample_forward.3} parent=0 // pred_fallthru
    _
  // Predicated region
  $region10: #{downsample_forward.3} parent=0 // pred_check
    _
  $region11: #{downsample_forward.3} parent=0 // pred_check_branch
    %14 = sbr.rel (0) target = $region13
  $region12: #{downsample_forward.3} parent=0 // pred_region
    _
  $region13: #{downsample_forward.3} parent=0 // pred_fallthru
    _
  // Predicated region
  $region14: #{downsample_forward.3} parent=0 // pred_check
    _
  $region15: #{downsample_forward.3} parent=0 // pred_check_branch
    %16 = sbr.rel (0) target = $region17
  $region16: #{downsample_forward.3} parent=0 // pred_region
    _
  $region17: #{downsample_forward.3} parent=0 // pred_fallthru
    _
  %v17 = vld [vmem:[%s1] sm:$0xff]
  %v18 = vld [vmem:[%s2] sm:$0xff]
  %v19 = vld [vmem:[%s3] sm:$0xff]
  %v20 = vld [vmem:[%s0] sm:$0xf]
  %vm21 = vcmask 31744
  %v23 = vsel %vm21, %v17, 0
  %vm25 = vcmask 1043456
  %v27 = vsel %vm25, %v20, 0
  %29 = vmatprep.subr.mxu0 0.0
  %30 = vmatpush1.msra.mxu0 %v27
  %31 = vmatprep.subr.mxu0 0.0
  %32 = vmatpush1.msra.mxu0 0.0
  %33 = vmatprep.subr.mxu0 0.0
  %34 = vmatpush1.msra.mxu0 0.0
  %35 = vmatprep.subr.mxu0 0.0
  %36 = vmatpush1.msra.mxu0 0.0
  %37 = vmatprep.subr.mxu0 0.0
  %38 = vmatpush1.msra.mxu0 0.0
  %39 = vmatprep.subr.mxu0 0.0
  %40 = vmatpush1.msra.mxu0 0.0
  %41 = vmatprep.subr.mxu0 0.0
  %42 = vmatpush1.msra.mxu0 0.0
  %43 = vmatprep.subr.mxu0 0.0
  %44 = vmatpush1.msra.mxu0 0.0
  %45 = vmatprep.subr.mxu0 0.0
  %46 = vmatpush1.msra.mxu0 0.0
  %47 = vmatprep.subr.mxu0 0.0
  %48 = vmatpush1.msra.mxu0 0.0
  %49 = vmatprep.subr.mxu0 0.0
  %50 = vmatpush1.msra.mxu0 0.0
  %51 = vmatprep.subr.mxu0 0.0
  %52 = vmatpush1.msra.mxu0 0.0
  %53 = vmatprep.subr.mxu0 0.0
  %54 = vmatpush1.msra.mxu0 0.0
  %55 = vmatprep.subr.mxu0 0.0
  %56 = vmatpush1.msra.mxu0 0.0
  %57 = vmatprep.subr.mxu0 0.0
  %58 = vmatpush1.msra.mxu0 0.0
  %59 = vmatprep.subr.mxu0 0.0
  %60 = vmatpush1.msra.mxu0 0.0
  %61 = vmatprep.subr.mxu0 0.0
  %62 = vmatpush1.msra.mxu0 0.0
  %63 = vmatprep.subr.mxu0 0.0
  %64 = vmatpush1.msra.mxu0 0.0
  %65 = vmatprep.subr.mxu0 0.0
  %66 = vmatpush1.msra.mxu0 0.0
  %67 = vmatprep.subr.mxu0 0.0
  %68 = vmatpush1.msra.mxu0 0.0
  %69 = vmatprep.subr.mxu0 0.0
  %70 = vmatpush1.msra.mxu0 0.0
  %71 = vmatprep.subr.mxu0 0.0
  %72 = vmatpush1.msra.mxu0 0.0
  %73 = vmatprep.subr.mxu0 0.0
  %74 = vmatpush1.msra.mxu0 0.0
  %75 = vmatprep.subr.mxu0 0.0
  %76 = vmatpush1.msra.mxu0 0.0
  %77 = vmatprep.subr.mxu0 0.0
  %78 = vmatpush1.msra.mxu0 0.0
  %79 = vmatprep.subr.mxu0 0.0
  %80 = vmatpush1.msra.mxu0 0.0
  %81 = vmatprep.subr.mxu0 0.0
  %82 = vmatpush1.msra.mxu0 0.0
  %83 = vmatprep.subr.mxu0 0.0
  %84 = vmatpush1.msra.mxu0 0.0
  %85 = vmatprep.subr.mxu0 0.0
  %86 = vmatpush1.msra.mxu0 0.0
  %87 = vmatprep.subr.mxu0 0.0
  %88 = vmatpush1.msra.mxu0 0.0
  %89 = vmatprep.subr.mxu0 0.0
  %90 = vmatpush1.msra.mxu0 0.0
  %91 = vmatprep.subr.mxu0 0.0
  %92 = vmatpush1.msra.mxu0 0.0
  %93 = vmatprep.mubr.f32.mxu0 0.0
  %94 = vmatmul.mubr.f32.gmra.mrb[0].mxu0 %v23
  %v95 = vpop.f32.mrb[0].mxu0
  %v96 = vadd.f32 0.0, %v95
  %v97 = vpop.f32.mrb[0].mxu0
  %98 = vdwg.mxu0
  %100 = vset.pattern.permute.xlu0 0
  %101 = vperm.xlu0 %100, %v18
  %v102 = vpop.permute.xlu0 %101
  %v104 = vmul.f32 %v96, %v102
  %106 = vset.pattern.permute.xlu0 0
  %107 = vperm.xlu0 %106, %v19
  %v108 = vpop.permute.xlu0 %107
  %v110 = vadd.f32 %v104, %v108
  %vm111 = vcmask 523264
  %112 = vst.msk [vmem:[%s4] sm:$0xff] %vm111, %v110
  %s113 = scalar_lea.vmem %s0, 4
  %v114 = vld [vmem:[%s113] sm:$0xf]
  %v116 = vsel %vm25, %v114, 0
  %118 = vmatprep.subr.mxu0 0.0
  %119 = vmatpush1.msra.mxu0 %v116
  %120 = vmatprep.subr.mxu0 0.0
  %121 = vmatpush1.msra.mxu0 0.0
  %122 = vmatprep.subr.mxu0 0.0
  %123 = vmatpush1.msra.mxu0 0.0
  %124 = vmatprep.subr.mxu0 0.0
  %125 = vmatpush1.msra.mxu0 0.0
  %126 = vmatprep.subr.mxu0 0.0
  %127 = vmatpush1.msra.mxu0 0.0
  %128 = vmatprep.subr.mxu0 0.0
  %129 = vmatpush1.msra.mxu0 0.0
  %130 = vmatprep.subr.mxu0 0.0
  %131 = vmatpush1.msra.mxu0 0.0
  %132 = vmatprep.subr.mxu0 0.0
  %133 = vmatpush1.msra.mxu0 0.0
  %134 = vmatprep.subr.mxu0 0.0
  %135 = vmatpush1.msra.mxu0 0.0
  %136 = vmatprep.subr.mxu0 0.0
  %137 = vmatpush1.msra.mxu0 0.0
  %138 = vmatprep.subr.mxu0 0.0
  %139 = vmatpush1.msra.mxu0 0.0
  %140 = vmatprep.subr.mxu0 0.0
  %141 = vmatpush1.msra.mxu0 0.0
  %142 = vmatprep.subr.mxu0 0.0
  %143 = vmatpush1.msra.mxu0 0.0
  %144 = vmatprep.subr.mxu0 0.0
  %145 = vmatpush1.msra.mxu0 0.0
  %146 = vmatprep.subr.mxu0 0.0
  %147 = vmatpush1.msra.mxu0 0.0
  %148 = vmatprep.subr.mxu0 0.0
  %149 = vmatpush1.msra.mxu0 0.0
  %150 = vmatprep.subr.mxu0 0.0
  %151 = vmatpush1.msra.mxu0 0.0
  %152 = vmatprep.subr.mxu0 0.0
  %153 = vmatpush1.msra.mxu0 0.0
  %154 = vmatprep.subr.mxu0 0.0
  %155 = vmatpush1.msra.mxu0 0.0
  %156 = vmatprep.subr.mxu0 0.0
  %157 = vmatpush1.msra.mxu0 0.0
  %158 = vmatprep.subr.mxu0 0.0
  %159 = vmatpush1.msra.mxu0 0.0
  %160 = vmatprep.subr.mxu0 0.0
  %161 = vmatpush1.msra.mxu0 0.0
  %162 = vmatprep.subr.mxu0 0.0
  %163 = vmatpush1.msra.mxu0 0.0
  %164 = vmatprep.subr.mxu0 0.0
  %165 = vmatpush1.msra.mxu0 0.0
  %166 = vmatprep.subr.mxu0 0.0
  %167 = vmatpush1.msra.mxu0 0.0
  %168 = vmatprep.subr.mxu0 0.0
  %169 = vmatpush1.msra.mxu0 0.0
  %170 = vmatprep.subr.mxu0 0.0
  %171 = vmatpush1.msra.mxu0 0.0
  %172 = vmatprep.subr.mxu0 0.0
  %173 = vmatpush1.msra.mxu0 0.0
  %174 = vmatprep.subr.mxu0 0.0
  %175 = vmatpush1.msra.mxu0 0.0
  %176 = vmatprep.subr.mxu0 0.0
  %177 = vmatpush1.msra.mxu0 0.0
  %178 = vmatprep.subr.mxu0 0.0
  %179 = vmatpush1.msra.mxu0 0.0
  %180 = vmatprep.subr.mxu0 0.0
  %181 = vmatpush1.msra.mxu0 0.0
  %182 = vmatprep.mubr.f32.mxu0 0.0
  %183 = vmatmul.mubr.f32.gmra.mrb[0].mxu0 %v23
  %v184 = vpop.f32.mrb[0].mxu0
  %v185 = vadd.f32 0.0, %v184
  %v186 = vpop.f32.mrb[0].mxu0
  %187 = vdwg.mxu0
  %v188 = vmul.f32 %v185, %v102
  %v189 = vadd.f32 %v188, %v108
  %s190 = scalar_lea.vmem %s4, 8
  %191 = vst.msk [vmem:[%s190] sm:$0xff] %vm111, %v189
  // Predicated region
  $region18: #{downsample_forward.3} parent=0 // pred_check
    _
  $region19: #{downsample_forward.3} parent=0 // pred_check_branch
    %193 = sbr.rel (0) target = $region21
  $region20: #{downsample_forward.3} parent=0 // pred_region
    _
  $region21: #{downsample_forward.3} parent=0 // pred_fallthru
    _
  // Predicated region
  $region22: #{downsample_forward.3} parent=0 // pred_check
    _
  $region23: #{downsample_forward.3} parent=0 // pred_check_branch
    %195 = sbr.rel (0) target = $region25
  $region24: #{downsample_forward.3} parent=0 // pred_region
    _
  $region25: #{downsample_forward.3} parent=0 // pred_fallthru
    _

</llo_original>
